<compile_context>
chip_gen: v7x
topology: tpu7x:2x2x1
jax: 0.10.0
libtpu: 0.0.40
codegen_flags: <defaults>
</compile_context>

<pallas_src>
import jax
import jax.numpy as jnp
from jax.experimental import pallas as pl
from jax.experimental.pallas import tpu as pltpu


def _softplus(x):
    # Numerically stable softplus: max(x, 0) + log1p(exp(-|x|)).
    return jnp.maximum(x, 0.0) + jnp.log1p(jnp.exp(-jnp.abs(x)))


def time2centerline_kernel(obs_ref, lc_ref, w_obs_ref, w_lc_ref, ds_bias_ref,
                           heads_ref, head_bias_ref, t_ref, c_ref):
    # Per-batch hidden contribution on the MXU: (block_bs, H).
    h_b = (jnp.dot(obs_ref[...], w_obs_ref[...],
                   preferred_element_type=jnp.float32)
           + jnp.dot(lc_ref[...], w_lc_ref[...],
                     preferred_element_type=jnp.float32))

    # Broadcast-add the precomputed per-prediction bias (ds @ W_ds + b1):
    # (block_bs, P, H). Hidden stays on lanes -> no relayout.
    h = h_b[:, None, :] + ds_bias_ref[...][None, :, :]
    h = jnp.where(h > 0, h, 0.1 * h)                      # LeakyReLU(0.1)

    # Heads as VPU mul + lane reduction (no N=1 MXU drains). Results are
    # directly lane-dense (block_bs, P).
    heads = heads_ref[...]                                # (2, H)  [wt; wc]
    wt = heads[0:1, :][None, :, :]                        # (1, 1, H)
    wc = heads[1:2, :][None, :, :]                        # (1, 1, H)
    t_raw = jnp.sum(h * wt, axis=-1) + head_bias_ref[0, 0]
    c_raw = jnp.sum(h * wc, axis=-1) + head_bias_ref[0, 1]

    t_ref[...] = _softplus(t_raw) + 0.01                  # time_predictor + 0.01
    c_ref[...] = c_raw                                    # confidence_predictor


def prepare_params(params, obs_dim, lc_dim):
    """One-time algebraic restructuring of the module parameters (not per-call)."""
    w1 = params["w1"].astype(jnp.float32)                 # (input_dim, hidden)
    w_obs = w1[:obs_dim]                                  # (obs_dim, hidden)
    w_lc = w1[obs_dim:obs_dim + lc_dim]                   # (lc_dim, hidden)
    w_ds = w1[obs_dim + lc_dim:]                          # (ds_hidden, hidden)

    ds = params["driving_style"][0].astype(jnp.float32)   # (n_predict, ds_hidden)
    ds_bias = ds @ w_ds + params["b1"].astype(jnp.float32)  # (n_predict, hidden)

    heads = jnp.concatenate(
        [params["wt"].reshape(1, -1), params["wc"].reshape(1, -1)],
        axis=0).astype(jnp.float32)                       # (2, hidden)  [wt; wc]
    head_bias = jnp.concatenate(
        [params["bt"].reshape(1, 1), params["bc"].reshape(1, 1)],
        axis=1).astype(jnp.float32)                       # (1, 2)       [bt, bc]

    return {"w_obs": w_obs, "w_lc": w_lc, "ds_bias": ds_bias,
            "heads": heads, "head_bias": head_bias}


def time2centerline_forward(obs_feature, lane_change_feature, prepared, n_predict):
    """Replicates Time2Centerline.forward with restructured parameters.

    obs_feature:         (bs, obs_dim)
    lane_change_feature: (bs, lc_dim)
    returns: (time_output, confidence_output), each of shape (bs, n_predict)
    """
    bs = obs_feature.shape[0]
    P = n_predict
    obs = obs_feature.astype(jnp.float32)
    lc = lane_change_feature.astype(jnp.float32)
    obs_dim = obs.shape[-1]
    lc_dim = lc.shape[-1]
    hidden_dim = prepared["w_obs"].shape[-1]

    # Single grid step at these toy sizes; for production bs use a row block of
    # ~1024 here and keep the same specs (weights stay pinned at block 0).
    block_bs = bs
    grid = (pl.cdiv(bs, block_bs),)

    row_spec = lambda cols: pl.BlockSpec((block_bs, cols), lambda i: (i, 0))
    pin_spec = lambda shape: pl.BlockSpec(shape, lambda i: (0, 0))

    t, c = pl.pallas_call(
        time2centerline_kernel,
        out_shape=(jax.ShapeDtypeStruct((bs, P), jnp.float32),
                   jax.ShapeDtypeStruct((bs, P), jnp.float32)),
        grid=grid,
        in_specs=[
            row_spec(obs_dim),                      # obs features
            row_spec(lc_dim),                       # lane-change features
            pin_spec((obs_dim, hidden_dim)),        # W_obs
            pin_spec((lc_dim, hidden_dim)),         # W_lc
            pin_spec((P, hidden_dim)),              # ds_bias = ds @ W_ds + b1
            pin_spec((2, hidden_dim)),              # [wt; wc]
            pl.BlockSpec((1, 2), lambda i: (0, 0),  # [bt, bc] scalars in SMEM
                         memory_space=pltpu.MemorySpace.SMEM),
        ],
        out_specs=(pl.BlockSpec((block_bs, P), lambda i: (i, 0)),
                   pl.BlockSpec((block_bs, P), lambda i: (i, 0))),
        compiler_params=pltpu.CompilerParams(
            dimension_semantics=("parallel",)),
    )(obs, lc, prepared["w_obs"], prepared["w_lc"], prepared["ds_bias"],
      prepared["heads"], prepared["head_bias"])

    return t, c


def init_params(key, input_dim, driving_style_hidden_size, hidden_dim, n_predict):
    """Deterministic synthetic parameter init (mirrors shapes in __init__)."""
    ks = jax.random.split(key, 7)
    # driving_style: torch.randn(1, n_predict, driving_style_hidden_size)
    driving_style = jax.random.normal(
        ks[0], (1, n_predict, driving_style_hidden_size), dtype=jnp.float32)

    def linear_init(kw, kb, fan_in, fan_out):
        bound = 1.0 / jnp.sqrt(fan_in)
        w = jax.random.uniform(kw, (fan_in, fan_out), jnp.float32, -bound, bound)
        b = jax.random.uniform(kb, (1, fan_out), jnp.float32, -bound, bound)
        return w, b

    w1, b1 = linear_init(ks[1], ks[2], input_dim, hidden_dim)
    wt, bt = linear_init(ks[3], ks[4], hidden_dim, 1)
    wc, bc = linear_init(ks[5], ks[6], hidden_dim, 1)
    return {"driving_style": driving_style,
            "w1": w1, "b1": b1, "wt": wt, "bt": bt, "wc": wc, "bc": bc}


def reference_forward(obs, lc, params, n_predict):
    """Pure-JAX mirror of the PyTorch forward (f32) for correctness checking."""
    bs = obs.shape[0]
    ds = jnp.broadcast_to(params["driving_style"],
                          (bs, n_predict, params["driving_style"].shape[-1]))
    obs_r = jnp.broadcast_to(obs[:, None, :], (bs, n_predict, obs.shape[-1]))
    lc_r = jnp.broadcast_to(lc[:, None, :], (bs, n_predict, lc.shape[-1]))
    x = jnp.concatenate([obs_r, lc_r, ds], axis=-1)
    h = x @ params["w1"] + params["b1"]
    h = jnp.where(h > 0, h, 0.1 * h)
    t = jax.nn.softplus((h @ params["wt"] + params["bt"])[..., 0]) + 0.01
    c = (h @ params["wc"] + params["bc"])[..., 0]
    return t, c


if __name__ == "__main__":
    # Small shapes consistent with the module.
    bs = 2
    obs_dim = 16
    lc_dim = 8
    driving_style_hidden_size = 8
    input_dim = obs_dim + lc_dim + driving_style_hidden_size   # 32
    hidden_dim = 32
    n_predict = 6

    key = jax.random.PRNGKey(0)
    k_obs, k_lc, k_par = jax.random.split(key, 3)
    obs_feature = jax.random.normal(k_obs, (bs, obs_dim), dtype=jnp.float32)
    lane_change_feature = jax.random.normal(k_lc, (bs, lc_dim), dtype=jnp.float32)

    params = init_params(k_par, input_dim, driving_style_hidden_size,
                         hidden_dim, n_predict)
    prepared = prepare_params(params, obs_dim, lc_dim)

    time_out, conf_out = time2centerline_forward(
        obs_feature, lane_change_feature, prepared, n_predict)
    jax.block_until_ready((time_out, conf_out))

    assert time_out.shape == (bs, n_predict)
    assert conf_out.shape == (bs, n_predict)
    # softplus(.) + 0.01 > 0
    assert bool(jnp.all(time_out > 0.0))

    # Correctness vs. the unrestructured reference forward.
    t_ref, c_ref = reference_forward(obs_feature, lane_change_feature,
                                     params, n_predict)
    assert bool(jnp.allclose(time_out, t_ref, rtol=1e-4, atol=1e-4))
    assert bool(jnp.allclose(conf_out, c_ref, rtol=1e-4, atol=1e-4))

    print("KERNEL_OK")
</pallas_src>

<mosaic_0001>
module attributes {stable_mosaic.version = 11 : i64} {
  func.func @time2centerline_kernel(%arg0: i32, %arg1: memref<2x16xf32, #tpu.memory_space<vmem>>, %arg2: memref<2x8xf32, #tpu.memory_space<vmem>>, %arg3: memref<16x32xf32, #tpu.memory_space<vmem>>, %arg4: memref<8x32xf32, #tpu.memory_space<vmem>>, %arg5: memref<6x32xf32, #tpu.memory_space<vmem>>, %arg6: memref<2x32xf32, #tpu.memory_space<vmem>>, %arg7: memref<1x2xf32, #tpu.memory_space<smem>>, %arg8: memref<2x6xf32, #tpu.memory_space<vmem>>, %arg9: memref<2x6xf32, #tpu.memory_space<vmem>>) attributes {dimension_semantics = [#tpu.dimension_semantics<parallel>], iteration_bounds = array<i64: 1>, scalar_prefetch = 0 : i64, scratch_operands = 0 : i64, tpu.core_type = #tpu.core_type<tc>, window_params = [{transform_indices = @transform_0, window_bounds = array<i64: 2, 16>}, {transform_indices = @transform_1, window_bounds = array<i64: 2, 8>}, {pipeline_mode = #tpu.pipeline_mode<synchronous>, transform_indices = @transform_2, window_bounds = array<i64: 16, 32>}, {pipeline_mode = #tpu.pipeline_mode<synchronous>, transform_indices = @transform_3, window_bounds = array<i64: 8, 32>}, {pipeline_mode = #tpu.pipeline_mode<synchronous>, transform_indices = @transform_4, window_bounds = array<i64: 6, 32>}, {pipeline_mode = #tpu.pipeline_mode<synchronous>, transform_indices = @transform_5, window_bounds = array<i64: 2, 32>}, {transform_indices = @transform_6, window_bounds = array<i64: 1, 2>}, {transform_indices = @transform_7, window_bounds = array<i64: 2, 6>}, {transform_indices = @transform_8, window_bounds = array<i64: 2, 6>}]} {
    %c0 = arith.constant 0 : index
    %c0_0 = arith.constant 0 : index
    %0 = vector.load %arg1[%c0, %c0_0] : memref<2x16xf32, #tpu.memory_space<vmem>>, vector<2x16xf32>
    %c0_1 = arith.constant 0 : index
    %c0_2 = arith.constant 0 : index
    %1 = vector.load %arg3[%c0_1, %c0_2] : memref<16x32xf32, #tpu.memory_space<vmem>>, vector<16x32xf32>
    %cst = arith.constant dense<0.000000e+00> : vector<2x32xf32>
    %2 = tpu.matmul %0, %1, %cst {dimension_numbers = #tpu.dot_dimension_numbers<[1], [0], [0], [1], [0, 0, 1, 1], [], []>} : vector<2x16xf32>, vector<16x32xf32>, vector<2x32xf32> -> vector<2x32xf32>
    %c0_3 = arith.constant 0 : index
    %c0_4 = arith.constant 0 : index
    %3 = vector.load %arg2[%c0_3, %c0_4] : memref<2x8xf32, #tpu.memory_space<vmem>>, vector<2x8xf32>
    %c0_5 = arith.constant 0 : index
    %c0_6 = arith.constant 0 : index
    %4 = vector.load %arg4[%c0_5, %c0_6] : memref<8x32xf32, #tpu.memory_space<vmem>>, vector<8x32xf32>
    %cst_7 = arith.constant dense<0.000000e+00> : vector<2x32xf32>
    %5 = tpu.matmul %3, %4, %cst_7 {dimension_numbers = #tpu.dot_dimension_numbers<[1], [0], [0], [1], [0, 0, 1, 1], [], []>} : vector<2x8xf32>, vector<8x32xf32>, vector<2x32xf32> -> vector<2x32xf32>
    %6 = arith.addf %2, %5 : vector<2x32xf32>
    %7 = vector.shape_cast %6 : vector<2x32xf32> to vector<2x1x32xf32>
    %c0_8 = arith.constant 0 : index
    %c0_9 = arith.constant 0 : index
    %8 = vector.load %arg5[%c0_8, %c0_9] : memref<6x32xf32, #tpu.memory_space<vmem>>, vector<6x32xf32>
    %9 = vector.shape_cast %8 : vector<6x32xf32> to vector<1x6x32xf32>
    %10 = vector.broadcast %7 : vector<2x1x32xf32> to vector<2x6x32xf32>
    %11 = vector.broadcast %9 : vector<1x6x32xf32> to vector<2x6x32xf32>
    %12 = arith.addf %10, %11 : vector<2x6x32xf32>
    %cst_10 = arith.constant 0.000000e+00 : f32
    %13 = vector.broadcast %cst_10 : f32 to vector<2x6x32xf32>
    %14 = arith.cmpf ogt, %12, %13 : vector<2x6x32xf32>
    %cst_11 = arith.constant 1.000000e-01 : f32
    %15 = vector.broadcast %cst_11 : f32 to vector<2x6x32xf32>
    %16 = arith.mulf %15, %12 : vector<2x6x32xf32>
    %17 = arith.select %14, %12, %16 : vector<2x6x32xi1>, vector<2x6x32xf32>
    %c0_12 = arith.constant 0 : index
    %c0_13 = arith.constant 0 : index
    %18 = vector.load %arg6[%c0_12, %c0_13] : memref<2x32xf32, #tpu.memory_space<vmem>>, vector<2x32xf32>
    %19 = vector.extract_strided_slice %18 {offsets = [0, 0], sizes = [1, 32], strides = [1, 1]} : vector<2x32xf32> to vector<1x32xf32>
    %20 = vector.shape_cast %19 : vector<1x32xf32> to vector<1x1x32xf32>
    %21 = vector.extract_strided_slice %18 {offsets = [1, 0], sizes = [1, 32], strides = [1, 1]} : vector<2x32xf32> to vector<1x32xf32>
    %22 = vector.shape_cast %21 : vector<1x32xf32> to vector<1x1x32xf32>
    %23 = vector.broadcast %20 : vector<1x1x32xf32> to vector<2x6x32xf32>
    %24 = arith.mulf %17, %23 : vector<2x6x32xf32>
    %cst_14 = arith.constant dense<0.000000e+00> : vector<2x6xf32>
    %25 = vector.multi_reduction <add>, %24, %cst_14 [2] : vector<2x6x32xf32> to vector<2x6xf32>
    %c0_15 = arith.constant 0 : index
    %c0_16 = arith.constant 0 : index
    %26 = memref.load %arg7[%c0_15, %c0_16] : memref<1x2xf32, #tpu.memory_space<smem>>
    %27 = vector.broadcast %26 : f32 to vector<2x6xf32>
    %28 = arith.addf %25, %27 : vector<2x6xf32>
    %29 = vector.broadcast %22 : vector<1x1x32xf32> to vector<2x6x32xf32>
    %30 = arith.mulf %17, %29 : vector<2x6x32xf32>
    %cst_17 = arith.constant dense<0.000000e+00> : vector<2x6xf32>
    %31 = vector.multi_reduction <add>, %30, %cst_17 [2] : vector<2x6x32xf32> to vector<2x6xf32>
    %c0_18 = arith.constant 0 : index
    %c1 = arith.constant 1 : index
    %32 = memref.load %arg7[%c0_18, %c1] : memref<1x2xf32, #tpu.memory_space<smem>>
    %33 = vector.broadcast %32 : f32 to vector<2x6xf32>
    %34 = arith.addf %31, %33 : vector<2x6xf32>
    %cst_19 = arith.constant 0.000000e+00 : f32
    %35 = vector.broadcast %cst_19 : f32 to vector<2x6xf32>
    %36 = arith.maximumf %28, %35 : vector<2x6xf32>
    %37 = math.absf %28 : vector<2x6xf32>
    %cst_20 = arith.constant 0.000000e+00 : f32
    %38 = vector.broadcast %cst_20 : f32 to vector<2x6xf32>
    %39 = arith.subf %38, %37 : vector<2x6xf32>
    %40 = math.exp %39 : vector<2x6xf32>
    %41 = math.log1p %40 : vector<2x6xf32>
    %42 = arith.addf %36, %41 : vector<2x6xf32>
    %cst_21 = arith.constant 0.00999999977 : f32
    %43 = vector.broadcast %cst_21 : f32 to vector<2x6xf32>
    %44 = arith.addf %42, %43 : vector<2x6xf32>
    %c0_22 = arith.constant 0 : index
    %c0_23 = arith.constant 0 : index
    %45 = vector.load %arg8[%c0_22, %c0_23] : memref<2x6xf32, #tpu.memory_space<vmem>>, vector<2x6xf32>
    tpu.vector_store %arg8[%c0_22, %c0_23], %44 {strides = array<i32>} : memref<2x6xf32, #tpu.memory_space<vmem>>, vector<2x6xf32>,
    %c0_24 = arith.constant 0 : index
    %c0_25 = arith.constant 0 : index
    %46 = vector.load %arg9[%c0_24, %c0_25] : memref<2x6xf32, #tpu.memory_space<vmem>>, vector<2x6xf32>
    tpu.vector_store %arg9[%c0_24, %c0_25], %34 {strides = array<i32>} : memref<2x6xf32, #tpu.memory_space<vmem>>, vector<2x6xf32>,
    return
  }
  func.func @transform_0(%arg0: i32) -> (i32, i32) {
    %c0_i32 = arith.constant 0 : i32
    %c0_i32_0 = arith.constant 0 : i32
    return %arg0, %c0_i32 : i32, i32
  }
  func.func @transform_1(%arg0: i32) -> (i32, i32) {
    %c0_i32 = arith.constant 0 : i32
    %c0_i32_0 = arith.constant 0 : i32
    return %arg0, %c0_i32 : i32, i32
  }
  func.func @transform_2(%arg0: i32) -> (i32, i32) {
    %c0_i32 = arith.constant 0 : i32
    %c0_i32_0 = arith.constant 0 : i32
    %c0_i32_1 = arith.constant 0 : i32
    return %c0_i32, %c0_i32_0 : i32, i32
  }
  func.func @transform_3(%arg0: i32) -> (i32, i32) {
    %c0_i32 = arith.constant 0 : i32
    %c0_i32_0 = arith.constant 0 : i32
    %c0_i32_1 = arith.constant 0 : i32
    return %c0_i32, %c0_i32_0 : i32, i32
  }
  func.func @transform_4(%arg0: i32) -> (i32, i32) {
    %c0_i32 = arith.constant 0 : i32
    %c0_i32_0 = arith.constant 0 : i32
    %c0_i32_1 = arith.constant 0 : i32
    return %c0_i32, %c0_i32_0 : i32, i32
  }
  func.func @transform_5(%arg0: i32) -> (i32, i32) {
    %c0_i32 = arith.constant 0 : i32
    %c0_i32_0 = arith.constant 0 : i32
    %c0_i32_1 = arith.constant 0 : i32
    return %c0_i32, %c0_i32_0 : i32, i32
  }
  func.func @transform_6(%arg0: i32) -> (i32, i32) {
    %c0_i32 = arith.constant 0 : i32
    %c0_i32_0 = arith.constant 0 : i32
    %c0_i32_1 = arith.constant 0 : i32
    return %c0_i32, %c0_i32_0 : i32, i32
  }
  func.func @transform_7(%arg0: i32) -> (i32, i32) {
    %c0_i32 = arith.constant 0 : i32
    %c0_i32_0 = arith.constant 0 : i32
    return %arg0, %c0_i32 : i32, i32
  }
  func.func @transform_8(%arg0: i32) -> (i32, i32) {
    %c0_i32 = arith.constant 0 : i32
    %c0_i32_0 = arith.constant 0 : i32
    return %arg0, %c0_i32 : i32, i32
  }
}

</mosaic_0001>

<llo_original>
// kernel: tpu_custom_call.1
$region0: #{tpu_custom_call.1}
  #allocation0 [shape = 'u32[]', space=smem, size = 0x4, offset = 0x4, fixed_abs, tag = 'smem constant byte address 0x4 - core index']
  #allocation1 [shape = 'u32[144,128]{1,0:T(1,128)}', space=vmem, size = 0x12000, scoped, tag = 'internal scratch']
  %s0 = inlined_call_operand.hbm [shape: f32[2,16], index: 0, kind: input, shape index: {}]
  %s1 = inlined_call_operand.vmem [shape: f32[2,8], index: 1, kind: input, shape index: {}]
  %s2 = inlined_call_operand.hbm [shape: f32[16,32], index: 2, kind: input, shape index: {}]
  %s3 = inlined_call_operand.vmem [shape: f32[8,32], index: 3, kind: input, shape index: {}]
  %s4 = inlined_call_operand.hbm [shape: f32[6,32], index: 4, kind: input, shape index: {}]
  %s5 = inlined_call_operand.vmem [shape: f32[2,32], index: 5, kind: input, shape index: {}]
  %s6 = inlined_call_operand.vmem [shape: f32[1,2], index: 6, kind: input, shape index: {}]
  %s7 = inlined_call_operand.hbm [shape: f32[2,6], index: 7, kind: output, shape index: {0}]
  %s8 = inlined_call_operand.hbm [shape: f32[2,6], index: 8, kind: output, shape index: {1}]
  %9 = xla_tuple %s7, %s8
  %s10 = sld [smem:[#allocation0]]
  $region62: #{tpu_custom_call.1} parent=0
    _
  %s12 = ssub.s32 1, %s10
  %s13 = scalar_select 0, %s12, %s10
  $region1: #{tpu_custom_call.1} parent=0
    #allocation2 [shape = 'u8[1024]{0}', space=vmem, size = 0x400, scoped, tag = 'input window, operand 0, single buffered']
    #allocation3 [shape = 's32[1]{0}', space=sflag, size = 0x4, scoped, tag = 'scoped memory for tpu_custom_call.1']
    #allocation4 [shape = 's32[1]{0}', space=sflag, size = 0x4, scoped, tag = 'scoped memory for tpu_custom_call.1']
    #allocation5 [shape = 's32[1]{0}', space=sflag, size = 0x4, scoped, tag = 'scoped memory for tpu_custom_call.1']
    #allocation6 [shape = 'u8[8192]{0}', space=vmem, size = 0x2000, scoped, tag = 'input window, operand 2, single buffered']
    #allocation7 [shape = 's32[1]{0}', space=sflag, size = 0x4, scoped, tag = 'scoped memory for tpu_custom_call.1']
    #allocation8 [shape = 'u8[4096]{0}', space=vmem, size = 0x1000, scoped, tag = 'input window, operand 4, single buffered']
    #allocation9 [shape = 'u8[512]{0}', space=smem, size = 0x200, scoped, tag = 'input window, operand 6, single buffered']
    #allocation10 [shape = 'u8[1024]{0}', space=vmem, size = 0x400, scoped, tag = 'output window, operand 0, single buffered']
    #allocation11 [shape = 'u8[1024]{0}', space=vmem, size = 0x400, scoped, tag = 'output window, operand 1, single buffered']
    #allocation12 [shape = 's32[1]{0}', space=sflag, size = 0x4, scoped, tag = 'scoped memory for tpu_custom_call.1']
    %14 = vsyncpa [#allocation3], 0
    %15 = vsyncpa [#allocation7], 0
    %16 = vsyncpa [#allocation5], 0
    %17 = vsyncpa [#allocation4], 0
    %18 = vsyncpa [#allocation12], 0
    // Predicated region
    $region2: #{tpu_custom_call.1} parent=1 // pred_check
      _
    $region3: #{tpu_custom_call.1} parent=1 // pred_check_branch
      %20 = sbr.rel (0) target = $region5
    $region4: #{tpu_custom_call.1} parent=1 // pred_region
      %s22 = ssub.s32 32, 32
      %23 = vsyncadd [#allocation3], %s22
      %s25 = sshll.u32 [#allocation2], 4
      %s26 = int_to_ptr.vmem [resolvable:$true] %s25
      %28 = dma.hbm_to_vmem [thread:$0]  %s0, 32, %s26, [#allocation3]
    $region5: #{tpu_custom_call.1} parent=1 // pred_fallthru
      _
    // Predicated region
    $region6: #{tpu_custom_call.1} parent=1 // pred_check
      _
    $region7: #{tpu_custom_call.1} parent=1 // pred_check_branch
      %30 = sbr.rel (0) target = $region9
    $region8: #{tpu_custom_call.1} parent=1 // pred_region
      _
    $region9: #{tpu_custom_call.1} parent=1 // pred_fallthru
      _
    // Predicated region
    $region10: #{tpu_custom_call.1} parent=1 // pred_check
      _
    $region11: #{tpu_custom_call.1} parent=1 // pred_check_branch
      %32 = sbr.rel (0) target = $region13
    $region12: #{tpu_custom_call.1} parent=1 // pred_region
      %s34 = ssub.s32 256, 256
      %35 = vsyncadd [#allocation7], %s34
      %s36 = sshll.u32 [#allocation6], 4
      %s37 = int_to_ptr.vmem [resolvable:$true] %s36
      %42 = dma.hbm_to_vmem [thread:$0]  %s2, 256, %s37, [#allocation7], 128, 128, 8
    $region13: #{tpu_custom_call.1} parent=1 // pred_fallthru
      _
    // Predicated region
    $region14: #{tpu_custom_call.1} parent=1 // pred_check
      _
    $region15: #{tpu_custom_call.1} parent=1 // pred_check_branch
      %44 = sbr.rel (0) target = $region17
    $region16: #{tpu_custom_call.1} parent=1 // pred_region
      _
    $region17: #{tpu_custom_call.1} parent=1 // pred_fallthru
      _
    // Predicated region
    $region18: #{tpu_custom_call.1} parent=1 // pred_check
      _
    $region19: #{tpu_custom_call.1} parent=1 // pred_check_branch
      %46 = sbr.rel (0) target = $region21
    $region20: #{tpu_custom_call.1} parent=1 // pred_region
      %s48 = ssub.s32 128, 128
      %49 = vsyncadd [#allocation7], %s48
      %s51 = sshll.u32 [#allocation8], 4
      %s52 = int_to_ptr.vmem [resolvable:$true] %s51
      %54 = dma.hbm_to_vmem [thread:$0]  %s4, 128, %s52, [#allocation7]
    $region21: #{tpu_custom_call.1} parent=1 // pred_fallthru
      _
    // Predicated region
    $region22: #{tpu_custom_call.1} parent=1 // pred_check
      _
    $region23: #{tpu_custom_call.1} parent=1 // pred_check_branch
      %56 = sbr.rel (0) target = $region25
    $region24: #{tpu_custom_call.1} parent=1 // pred_region
      _
    $region25: #{tpu_custom_call.1} parent=1 // pred_fallthru
      _
    // Predicated region
    $region26: #{tpu_custom_call.1} parent=1 // pred_check
      _
    $region27: #{tpu_custom_call.1} parent=1 // pred_check_branch
      %58 = sbr.rel (0) target = $region29
    $region28: #{tpu_custom_call.1} parent=1 // pred_region
      %s60 = ssub.s32 16, 16
      %61 = vsyncadd [#allocation5], %s60
      %s63 = sshll.u32 %s6, 4
      %s64 = int_to_ptr.vmem [resolvable:$true] %s63
      %66 = dma.vmem_to_smem %s64, 16, [#allocation9], [#allocation5]
    $region29: #{tpu_custom_call.1} parent=1 // pred_fallthru
      _
    // Predicated region
    $region30: #{tpu_custom_call.1} parent=1 // pred_check
      _
    $region31: #{tpu_custom_call.1} parent=1 // pred_check_branch
      %68 = sbr.rel (0) target = $region33
    $region32: #{tpu_custom_call.1} parent=1 // pred_region
      %69 = dma.done [#allocation3], 32
    $region33: #{tpu_custom_call.1} parent=1 // pred_fallthru
      _
    // Predicated region
    $region34: #{tpu_custom_call.1} parent=1 // pred_check
      _
    $region35: #{tpu_custom_call.1} parent=1 // pred_check_branch
      %71 = sbr.rel (0) target = $region37
    $region36: #{tpu_custom_call.1} parent=1 // pred_region
      %72 = dma.done [#allocation7], 256
    $region37: #{tpu_custom_call.1} parent=1 // pred_fallthru
      _
    // Predicated region
    $region38: #{tpu_custom_call.1} parent=1 // pred_check
      _
    $region39: #{tpu_custom_call.1} parent=1 // pred_check_branch
      %74 = sbr.rel (0) target = $region41
    $region40: #{tpu_custom_call.1} parent=1 // pred_region
      %75 = dma.done [#allocation7], 128
    $region41: #{tpu_custom_call.1} parent=1 // pred_fallthru
      _
    // Predicated region
    $region42: #{tpu_custom_call.1} parent=1 // pred_check
      _
    $region43: #{tpu_custom_call.1} parent=1 // pred_check_branch
      %77 = sbr.rel (0) target = $region45
    $region44: #{tpu_custom_call.1} parent=1 // pred_region
      %78 = dma.done [#allocation5], 16
    $region45: #{tpu_custom_call.1} parent=1 // pred_fallthru
      _
    %79 = sfence
    %v80 = vld [vmem:[#allocation2] sm:$0x3]
    %v81 = vld [vmem:[#allocation6] sm:$0xff]
    %v82 = vld [vmem:[#allocation6 + $0x8] sm:$0xff]
    %v83 = vld [vmem:[%s1] sm:$0x3]
    %v84 = vld [vmem:[%s3] sm:$0xff]
    %vm85 = vcmask 64512
    %v87 = vsel %vm85, %v83, 0
    %89 = vmatprep.subr.mxu0 0.0
    %90 = vmatpush1.msra.mxu0 %v84
    %91 = vmatprep.subr.mxu0 0.0
    %92 = vmatpush1.msra.mxu0 0.0
    %93 = vmatprep.subr.mxu0 0.0
    %94 = vmatpush1.msra.mxu0 0.0
    %95 = vmatprep.subr.mxu0 0.0
    %96 = vmatpush1.msra.mxu0 0.0
    %97 = vmatprep.subr.mxu0 0.0
    %98 = vmatpush1.msra.mxu0 0.0
    %99 = vmatprep.subr.mxu0 0.0
    %100 = vmatpush1.msra.mxu0 0.0
    %101 = vmatprep.subr.mxu0 0.0
    %102 = vmatpush1.msra.mxu0 0.0
    %103 = vmatprep.subr.mxu0 0.0
    %104 = vmatpush1.msra.mxu0 0.0
    %105 = vmatprep.subr.mxu0 0.0
    %106 = vmatpush1.msra.mxu0 0.0
    %107 = vmatprep.subr.mxu0 0.0
    %108 = vmatpush1.msra.mxu0 0.0
    %109 = vmatprep.subr.mxu0 0.0
    %110 = vmatpush1.msra.mxu0 0.0
    %111 = vmatprep.subr.mxu0 0.0
    %112 = vmatpush1.msra.mxu0 0.0
    %113 = vmatprep.subr.mxu0 0.0
    %114 = vmatpush1.msra.mxu0 0.0
    %115 = vmatprep.subr.mxu0 0.0
    %116 = vmatpush1.msra.mxu0 0.0
    %117 = vmatprep.subr.mxu0 0.0
    %118 = vmatpush1.msra.mxu0 0.0
    %119 = vmatprep.subr.mxu0 0.0
    %120 = vmatpush1.msra.mxu0 0.0
    %121 = vmatprep.subr.mxu0 0.0
    %122 = vmatpush1.msra.mxu0 0.0
    %123 = vmatprep.subr.mxu0 0.0
    %124 = vmatpush1.msra.mxu0 0.0
    %125 = vmatprep.subr.mxu0 0.0
    %126 = vmatpush1.msra.mxu0 0.0
    %127 = vmatprep.subr.mxu0 0.0
    %128 = vmatpush1.msra.mxu0 0.0
    %129 = vmatprep.subr.mxu0 0.0
    %130 = vmatpush1.msra.mxu0 0.0
    %131 = vmatprep.subr.mxu0 0.0
    %132 = vmatpush1.msra.mxu0 0.0
    %133 = vmatprep.subr.mxu0 0.0
    %134 = vmatpush1.msra.mxu0 0.0
    %135 = vmatprep.subr.mxu0 0.0
    %136 = vmatpush1.msra.mxu0 0.0
    %137 = vmatprep.subr.mxu0 0.0
    %138 = vmatpush1.msra.mxu0 0.0
    %139 = vmatprep.subr.mxu0 0.0
    %140 = vmatpush1.msra.mxu0 0.0
    %141 = vmatprep.subr.mxu0 0.0
    %142 = vmatpush1.msra.mxu0 0.0
    %143 = vmatprep.subr.mxu0 0.0
    %144 = vmatpush1.msra.mxu0 0.0
    %145 = vmatprep.subr.mxu0 0.0
    %146 = vmatpush1.msra.mxu0 0.0
    %147 = vmatprep.subr.mxu0 0.0
    %148 = vmatpush1.msra.mxu0 0.0
    %149 = vmatprep.subr.mxu0 0.0
    %150 = vmatpush1.msra.mxu0 0.0
    %151 = vmatprep.subr.mxu0 0.0
    %152 = vmatpush1.msra.mxu0 0.0
    %153 = vmatprep.mubr.f32.mxu0 0.0
    %154 = vmatmul.mubr.f32.gmra.mrb[0].mxu0 %v87
    %v155 = vpop.f32.mrb[0].mxu0
    %v156 = vadd.f32 0.0, %v155
    %v157 = vpop.f32.mrb[0].mxu0
    %158 = vdwg.mxu0
    %vm159 = vcmask 130048
    %v161 = vsel %vm159, %v80, 0
    %163 = vmatprep.subr.mxu0 0.0
    %164 = vmatpush1.msra.mxu0 %v81
    %165 = vmatprep.subr.mxu0 0.0
    %166 = vmatpush1.msra.mxu0 %v82
    %167 = vmatprep.subr.mxu0 0.0
    %168 = vmatpush1.msra.mxu0 0.0
    %169 = vmatprep.subr.mxu0 0.0
    %170 = vmatpush1.msra.mxu0 0.0
    %171 = vmatprep.subr.mxu0 0.0
    %172 = vmatpush1.msra.mxu0 0.0
    %173 = vmatprep.subr.mxu0 0.0
    %174 = vmatpush1.msra.mxu0 0.0
    %175 = vmatprep.subr.mxu0 0.0
    %176 = vmatpush1.msra.mxu0 0.0
    %177 = vmatprep.subr.mxu0 0.0
    %178 = vmatpush1.msra.mxu0 0.0
    %179 = vmatprep.subr.mxu0 0.0
    %180 = vmatpush1.msra.mxu0 0.0
    %181 = vmatprep.subr.mxu0 0.0
    %182 = vmatpush1.msra.mxu0 0.0
    %183 = vmatprep.subr.mxu0 0.0
    %184 = vmatpush1.msra.mxu0 0.0
    %185 = vmatprep.subr.mxu0 0.0
    %186 = vmatpush1.msra.mxu0 0.0
    %187 = vmatprep.subr.mxu0 0.0
    %188 = vmatpush1.msra.mxu0 0.0
    %189 = vmatprep.subr.mxu0 0.0
    %190 = vmatpush1.msra.mxu0 0.0
    %191 = vmatprep.subr.mxu0 0.0
    %192 = vmatpush1.msra.mxu0 0.0
    %193 = vmatprep.subr.mxu0 0.0
    %194 = vmatpush1.msra.mxu0 0.0
    %195 = vmatprep.subr.mxu0 0.0
    %196 = vmatpush1.msra.mxu0 0.0
    %197 = vmatprep.subr.mxu0 0.0
    %198 = vmatpush1.msra.mxu0 0.0
    %199 = vmatprep.subr.mxu0 0.0
    %200 = vmatpush1.msra.mxu0 0.0
    %201 = vmatprep.subr.mxu0 0.0
    %202 = vmatpush1.msra.mxu0 0.0
    %203 = vmatprep.subr.mxu0 0.0
    %204 = vmatpush1.msra.mxu0 0.0
    %205 = vmatprep.subr.mxu0 0.0
    %206 = vmatpush1.msra.mxu0 0.0
    %207 = vmatprep.subr.mxu0 0.0
    %208 = vmatpush1.msra.mxu0 0.0
    %209 = vmatprep.subr.mxu0 0.0
    %210 = vmatpush1.msra.mxu0 0.0
    %211 = vmatprep.subr.mxu0 0.0
    %212 = vmatpush1.msra.mxu0 0.0
    %213 = vmatprep.subr.mxu0 0.0
    %214 = vmatpush1.msra.mxu0 0.0
    %215 = vmatprep.subr.mxu0 0.0
    %216 = vmatpush1.msra.mxu0 0.0
    %217 = vmatprep.subr.mxu0 0.0
    %218 = vmatpush1.msra.mxu0 0.0
    %219 = vmatprep.subr.mxu0 0.0
    %220 = vmatpush1.msra.mxu0 0.0
    %221 = vmatprep.subr.mxu0 0.0
    %222 = vmatpush1.msra.mxu0 0.0
    %223 = vmatprep.subr.mxu0 0.0
    %224 = vmatpush1.msra.mxu0 0.0
    %225 = vmatprep.subr.mxu0 0.0
    %226 = vmatpush1.msra.mxu0 0.0
    %227 = vmatprep.mubr.f32.mxu0 0.0
    %228 = vmatmul.mubr.f32.gmra.mrb[0].mxu0 %v161
    %v229 = vpop.f32.mrb[0].mxu0
    %v230 = vadd.f32 %v156, %v229
    %v231 = vpop.f32.mrb[0].mxu0
    %232 = vdwg.mxu0
    %v235 = vunpack.c.l.s4 1966171168
    %v236 = vunpack.c.0.s8 %v235
    %v237 = vlaneseq
    %v238 = vshrl.u32 %v237, 7
    %v239 = vsub.s32 %v236, %v238
    %v240 = vrot.slane %v230, %v239
    %v241 = vcombine.high %v240, %v240
    %v243 = vunpack.c.l.s4 1966171168
    %v244 = vunpack.c.0.s8 %v243
    %v245 = vlaneseq
    %v246 = vshrl.u32 %v245, 7
    %v247 = vsub.s32 %v244, %v246
    %v248 = vrot.slane %v240, %v247
    %v250 = vunpack.c.l.s4 1966171168
    %v251 = vunpack.c.0.s8 %v250
    %v252 = vlaneseq
    %v253 = vshrl.u32 %v252, 7
    %v254 = vsub.s32 %v251, %v253
    %v255 = vrot.slane %v241, %v254
    %v256 = vld [vmem:[#allocation8] sm:$0x3f]
    %v257 = vlaneseq
    %v258 = vshrl.u32 %v257, 7
    %v259 = vsub.s32 0, %v258
    %v260 = vrot.slane %v248, %v259
    %v261 = vlaneseq
    %v262 = vshrl.u32 %v261, 7
    %v263 = vsub.s32 0, %v262
    %v264 = vrot.slane %v255, %v263
    %v267 = vadd.f32 %v260, %v256
    %v268 = vadd.f32 %v264, %v256
    %vm269 = vcmp.gt.f32.partialorder %v267, 0.0
    %vm270 = vcmp.gt.f32.partialorder %v268, 0.0
    %v271 = vmul.f32 %v267, 0.1
    %v272 = vmul.f32 %v268, 0.1
    %v273 = vsel %vm269, %v267, %v271
    %v274 = vsel %vm270, %v268, %v272
    %v275 = vld [vmem:[%s5] sm:$0x3]
    %v276 = vlaneseq
    %v277 = vshrl.u32 %v276, 7
    %v278 = vsub.s32 0, %v277
    %v279 = vrot.slane %v275, %v278
    %v280 = vmul.f32 %v273, %v279
    %v281 = vmul.f32 %v274, %v279
    %vm282 = vcmask 259072
    %v283 = vsel %vm282, %v280, 0.0
    %284 = vadd.xlane.f32.xlu0 %v283
    %v285 = vpop.xlane.xlu0 %284
    %v286 = vsel %vm282, %v281, 0.0
    %287 = vadd.xlane.f32.xlu0 %v286
    %v288 = vpop.xlane.xlu0 %287
    %s289 = sld [smem:[#allocation9]]
    %v290 = vstv %s289
    %v291 = vadd.f32 %v285, %v290
    %v292 = vadd.f32 %v288, %v290
    %v293 = vlaneseq
    %v294 = vshrl.u32 %v293, 7
    %v295 = vsub.s32 1, %v294
    %v296 = vrot.slane %v275, %v295
    %v297 = vmul.f32 %v273, %v296
    %v298 = vmul.f32 %v274, %v296
    %v299 = vsel %vm282, %v297, 0.0
    %300 = vadd.xlane.f32.xlu0 %v299
    %v301 = vpop.xlane.xlu0 %300
    %v302 = vsel %vm282, %v298, 0.0
    %303 = vadd.xlane.f32.xlu0 %v302
    %v304 = vpop.xlane.xlu0 %303
    %s305 = sld [smem:[#allocation9 + $0x1]]
    %v306 = vstv %s305
    %v307 = vadd.f32 %v301, %v306
    %v308 = vadd.f32 %v304, %v306
    %v309 = vmax.f32 %v291, 0.0
    %v310 = vmax.f32 %v292, 0.0
    %v311 = vand.u32 2147483647, %v291
    %v312 = vand.u32 2147483647, %v292
    %v313 = vsub.f32 0.0, %v311
    %v314 = vsub.f32 0.0, %v312
    %v315 = vmul.f32 %v313, 1.442695
    %v316 = vpow.pop %v315
    %v317 = vmul.f32 %v314, 1.442695
    %v318 = vpow.pop %v317
    %v319 = vadd.f32 %v316, 1.0
    %v320 = vlog2.pop %v319
    %v321 = vmul.f32 %v320, 0.6931472
    %v322 = vmul.f32 -0.5, %v316
    %v323 = vadd.f32 %v322, 1.0
    %v324 = vmul.f32 %v323, %v316
    %v325 = vand.u32 2147483647, %v316
    %vm326 = vcmp.lt.f32.partialorder %v325, 0.0004427343
    %v327 = vsel %vm326, %v324, %v321
    %v328 = vadd.f32 %v318, 1.0
    %v329 = vlog2.pop %v328
    %v330 = vmul.f32 %v329, 0.6931472
    %v331 = vmul.f32 -0.5, %v318
    %v332 = vadd.f32 %v331, 1.0
    %v333 = vmul.f32 %v332, %v318
    %v334 = vand.u32 2147483647, %v318
    %vm335 = vcmp.lt.f32.partialorder %v334, 0.0004427343
    %v336 = vsel %vm335, %v333, %v330
    %v337 = vadd.f32 %v309, %v327
    %v338 = vadd.f32 %v310, %v336
    %v339 = vadd.f32 %v337, 0.01
    %v340 = vadd.f32 %v338, 0.01
    %v343 = vlaneseq
    %v344 = vand.u32 %v343, 127
    %v345 = vlaneseq
    %v346 = vshrl.u32 %v345, 7
    %v347 = vsub.s32 %v344, %v346
    %v348 = vrot.slane %v339, %v347
    %v349 = vlaneseq
    %v350 = vshrl.u32 %v349, 7
    %v351 = vsub.s32 %v344, %v350
    %v352 = vrot.slane %v340, %v351
    %vm353 = vcmask 1041409
    %v354 = vsel %vm353, %v352, %v348
    %vm356 = vcmask 41984
    %357 = vst.msk [vmem:[#allocation10] sm:$0x3] %vm356, %v354
    %v360 = vlaneseq
    %v361 = vshrl.u32 %v360, 7
    %v362 = vsub.s32 %v344, %v361
    %v363 = vrot.slane %v307, %v362
    %v364 = vlaneseq
    %v365 = vshrl.u32 %v364, 7
    %v366 = vsub.s32 %v344, %v365
    %v367 = vrot.slane %v308, %v366
    %v368 = vsel %vm353, %v367, %v363
    %370 = vst.msk [vmem:[#allocation11] sm:$0x3] %vm356, %v368
    // Predicated region
    $region46: #{tpu_custom_call.1} parent=1 // pred_check
      _
    $region47: #{tpu_custom_call.1} parent=1 // pred_check_branch
      %372 = sbr.rel (0) target = $region49
    $region48: #{tpu_custom_call.1} parent=1 // pred_region
      %s374 = ssub.s32 32, 32
      %375 = vsyncadd [#allocation4], %s374
      %s377 = sshll.u32 [#allocation10], 4
      %s378 = int_to_ptr.vmem [resolvable:$true] %s377
      %380 = dma.vmem_to_hbm [thread:$0]  %s378, 32, %s7, [#allocation4]
    $region49: #{tpu_custom_call.1} parent=1 // pred_fallthru
      _
    // Predicated region
    $region50: #{tpu_custom_call.1} parent=1 // pred_check
      _
    $region51: #{tpu_custom_call.1} parent=1 // pred_check_branch
      %382 = sbr.rel (0) target = $region53
    $region52: #{tpu_custom_call.1} parent=1 // pred_region
      %s384 = ssub.s32 32, 32
      %385 = vsyncadd [#allocation12], %s384
      %s387 = sshll.u32 [#allocation11], 4
      %s388 = int_to_ptr.vmem [resolvable:$true] %s387
      %390 = dma.vmem_to_hbm [thread:$0]  %s388, 32, %s8, [#allocation12]
    $region53: #{tpu_custom_call.1} parent=1 // pred_fallthru
      _
    // Predicated region
    $region54: #{tpu_custom_call.1} parent=1 // pred_check
      _
    $region55: #{tpu_custom_call.1} parent=1 // pred_check_branch
      %392 = sbr.rel (0) target = $region57
    $region56: #{tpu_custom_call.1} parent=1 // pred_region
      %393 = dma.done [#allocation4], 32
    $region57: #{tpu_custom_call.1} parent=1 // pred_fallthru
      _
    // Predicated region
    $region58: #{tpu_custom_call.1} parent=1 // pred_check
      _
    $region59: #{tpu_custom_call.1} parent=1 // pred_check_branch
      %395 = sbr.rel (0) target = $region61
    $region60: #{tpu_custom_call.1} parent=1 // pred_region
      %396 = dma.done [#allocation12], 32
    $region61: #{tpu_custom_call.1} parent=1 // pred_fallthru
      _
    %397 = vsyncpa [#allocation3], 1
    %398 = vsyncpa [#allocation7], 1
    %399 = vsyncpa [#allocation4], 1
    %400 = vsyncpa [#allocation12], 1
    %401 = vsyncpa [#allocation5], 1

</llo_original>
